<compile_context>
chip_gen: v6e
topology: v6e:2x2x1
jax: 0.10.0
libtpu: 0.0.40
codegen_flags: <defaults>
</compile_context>

<pallas_src>
import functools

import jax
import jax.numpy as jnp
from jax.experimental import pallas as pl
from jax.experimental.pallas import tpu as pltpu

_LANE = 128
_SUBLANE = 8


def _conv_bn_relu_pool_kernel(x_ref, w_ref, shift_ref, o_ref, *, pool_size, pool_type):
    """One grid step produces M_tile = Bt*L_pool pooled rows.

    x_ref:     (pool_size, M_tile, KC)  im2col patches, one slab per pool offset
    w_ref:     (KC, C_pad)              conv weight with BN scale folded in
    shift_ref: (1, C_pad)               folded conv-bias + BN shift
    o_ref:     (M_tile, C_pad)          pooled activations (lane-dense, padded channels)
    """
    w = w_ref[...]
    shift = shift_ref[...]

    def window(p):
        # (M_tile, KC) @ (KC, C_pad) on the MXU, f32 accumulation.
        acc = jnp.dot(x_ref[p], w, preferred_element_type=jnp.float32)
        return jnp.maximum(acc + shift, 0.0)          # folded BN + ReLU

    pooled = window(0)
    for p in range(1, pool_size):                     # pooling = elementwise combine (VPU)
        nxt = window(p)
        pooled = jnp.maximum(pooled, nxt) if pool_type == 0 else pooled + nxt
    if pool_type == 1:
        pooled = pooled * (1.0 / pool_size)

    o_ref[...] = pooled.astype(o_ref.dtype)


def cnn_model_forward(x_ncl, params, *, kernel_size, stride, padding,
                      pool_type, pool_size, eps=1e-5, target_m=512):
    """x_ncl: (B, C_in, L) float32.  Returns (B, C_out, L_pool) like PyTorch."""
    w, b = params["w"], params["b"]
    gamma, beta = params["gamma"], params["beta"]
    mean, var = params["running_mean"], params["running_var"]

    B, C_in, L = x_ncl.shape
    C_out, _, K = w.shape
    assert K == kernel_size

    L_out = (L + 2 * padding - kernel_size) // stride + 1
    L_pool = (L_out - pool_size) // pool_size + 1     # floor mode
    KC = K * C_in
    C_pad = ((C_out + _LANE - 1) // _LANE) * _LANE    # lane-dense output channels

    # ---- Fold Conv bias + eval-mode BatchNorm into weight / shift (host-side glue) ----
    scale = gamma / jnp.sqrt(var + eps)                                   # (C_out,)
    shift = beta - mean * scale + b * scale                               # (C_out,)
    w_mat = jnp.transpose(w, (2, 1, 0)).reshape(KC, C_out) * scale[None, :]
    w_mat = jnp.pad(w_mat, ((0, 0), (0, C_pad - C_out)))                  # (KC, C_pad)
    shift_p = jnp.pad(shift, (0, C_pad - C_out)).reshape(1, C_pad)        # (1, C_pad)

    # ---- im2col with the pool window hoisted out as a leading axis (XLA glue) ----
    x_nlc = jnp.transpose(x_ncl, (0, 2, 1))                               # (B, L, C_in)
    x_padded = jnp.pad(x_nlc, ((0, 0), (padding, padding), (0, 0)))       # (B, L_pad, C_in)
    cols = jnp.concatenate(
        [x_padded[:, k:k + L_out * stride:stride, :] for k in range(K)], axis=-1)
    cols = cols[:, :L_pool * pool_size, :]                                # drop pool remainder
    cols = cols.reshape(B, L_pool, pool_size, KC)
    cols = jnp.transpose(cols, (2, 0, 1, 3))                              # (ps, B, L_pool, KC)

    # ---- batch-tile so each grid step feeds the MXU a large M tile ----
    Bt = max(1, min(B, -(-target_m // max(L_pool, 1))))                   # cdiv
    while Bt < B and (Bt * L_pool) % _SUBLANE != 0:                       # keep tile 8-aligned
        Bt += 1
    n_tiles = -(-B // Bt)
    B_padded = n_tiles * Bt
    if B_padded != B:
        cols = jnp.pad(cols, ((0, 0), (0, B_padded - B), (0, 0), (0, 0)))
    cols = cols.reshape(pool_size, B_padded * L_pool, KC)
    M_tile = Bt * L_pool

    kernel = functools.partial(_conv_bn_relu_pool_kernel,
                               pool_size=pool_size, pool_type=pool_type)

    out2d = pl.pallas_call(
        kernel,
        out_shape=jax.ShapeDtypeStruct((B_padded * L_pool, C_pad), x_ncl.dtype),
        grid_spec=pltpu.PrefetchScalarGridSpec(
            num_scalar_prefetch=0,
            grid=(n_tiles,),
            in_specs=[
                pl.BlockSpec((pool_size, M_tile, KC), lambda i: (0, i, 0)),
                pl.BlockSpec((KC, C_pad), lambda i: (0, 0)),
                pl.BlockSpec((1, C_pad), lambda i: (0, 0)),
            ],
            out_specs=pl.BlockSpec((M_tile, C_pad), lambda i: (i, 0)),
        ),
        compiler_params=pltpu.CompilerParams(dimension_semantics=("parallel",)),
    )(cols, w_mat, shift_p)

    out = out2d.reshape(B_padded, L_pool, C_pad)[:B, :, :C_out]           # strip padding
    return jnp.transpose(out, (0, 2, 1))                                  # (B, C_out, L_pool)


def _reference(x_ncl, params, *, kernel_size, stride, padding,
               pool_type, pool_size, eps=1e-5):
    """Pure-JAX reference mirroring the PyTorch module (eval-mode BN)."""
    w, b = params["w"], params["b"]
    y = jax.lax.conv_general_dilated(
        x_ncl, w, window_strides=(stride,), padding=[(padding, padding)],
        dimension_numbers=("NCH", "OIH", "NCH"))
    y = y + b[None, :, None]
    scale = params["gamma"] / jnp.sqrt(params["running_var"] + eps)
    shift = params["beta"] - params["running_mean"] * scale
    y = y * scale[None, :, None] + shift[None, :, None]
    y = jnp.maximum(y, 0.0)
    L_out = y.shape[-1]
    L_pool = (L_out - pool_size) // pool_size + 1
    y = y[..., :L_pool * pool_size].reshape(y.shape[0], y.shape[1], L_pool, pool_size)
    return jnp.max(y, -1) if pool_type == 0 else jnp.mean(y, -1)


if __name__ == "__main__":
    in_channel, out_channel = 4, 8
    kernel_size, stride, padding = 3, 1, 1
    pool_size = 2
    B, L = 2, 16

    key = jax.random.PRNGKey(0)
    k_x, k_w, k_b, k_g, k_bt, k_m, k_v = jax.random.split(key, 7)

    x = jax.random.normal(k_x, (B, in_channel, L), dtype=jnp.float32)
    params = {
        "w": jax.random.normal(k_w, (out_channel, in_channel, kernel_size),
                               dtype=jnp.float32) * 0.1,
        "b": jax.random.normal(k_b, (out_channel,), dtype=jnp.float32) * 0.1,
        "gamma": 1.0 + 0.1 * jax.random.normal(k_g, (out_channel,), dtype=jnp.float32),
        "beta": 0.1 * jax.random.normal(k_bt, (out_channel,), dtype=jnp.float32),
        "running_mean": 0.1 * jax.random.normal(k_m, (out_channel,), dtype=jnp.float32),
        "running_var": jnp.abs(1.0 + 0.1 * jax.random.normal(k_v, (out_channel,),
                                                             dtype=jnp.float32)),
    }

    ok = True
    for pool_type in (0, 1):   # 0 = MaxPool1d, 1 = AvgPool1d
        out = cnn_model_forward(x, params, kernel_size=kernel_size, stride=stride,
                                padding=padding, pool_type=pool_type,
                                pool_size=pool_size)
        out = jax.block_until_ready(out)
        ref = _reference(x, params, kernel_size=kernel_size, stride=stride,
                         padding=padding, pool_type=pool_type, pool_size=pool_size)
        assert out.shape == ref.shape == (B, out_channel, L // pool_size), out.shape
        err = float(jnp.max(jnp.abs(out - ref)))
        if not jnp.allclose(out, ref, atol=1e-5, rtol=1e-5):
            ok = False
            print(f"MISMATCH pool_type={pool_type} max_abs_err={err}")
    if ok:
        print("KERNEL_OK")
</pallas_src>

<mosaic_0001>
module attributes {stable_mosaic.version = 11 : i64} {
  func.func @_conv_bn_relu_pool_kernel(%arg0: i32, %arg1: memref<2x16x12xf32, #tpu.memory_space<vmem>>, %arg2: memref<12x128xf32, #tpu.memory_space<vmem>>, %arg3: memref<1x128xf32, #tpu.memory_space<vmem>>, %arg4: memref<16x128xf32, #tpu.memory_space<vmem>>) attributes {dimension_semantics = [#tpu.dimension_semantics<parallel>], iteration_bounds = array<i64: 1>, scalar_prefetch = 0 : i64, scratch_operands = 0 : i64, tpu.core_type = #tpu.core_type<tc>, window_params = [{transform_indices = @transform_0, window_bounds = array<i64: 2, 16, 12>}, {pipeline_mode = #tpu.pipeline_mode<synchronous>, transform_indices = @transform_1, window_bounds = array<i64: 12, 128>}, {pipeline_mode = #tpu.pipeline_mode<synchronous>, transform_indices = @transform_2, window_bounds = array<i64: 1, 128>}, {transform_indices = @transform_3, window_bounds = array<i64: 16, 128>}]} {
    %c0 = arith.constant 0 : index
    %c0_0 = arith.constant 0 : index
    %0 = vector.load %arg2[%c0, %c0_0] : memref<12x128xf32, #tpu.memory_space<vmem>>, vector<12x128xf32>
    %c0_1 = arith.constant 0 : index
    %c0_2 = arith.constant 0 : index
    %1 = vector.load %arg3[%c0_1, %c0_2] : memref<1x128xf32, #tpu.memory_space<vmem>>, vector<1x128xf32>
    %c0_3 = arith.constant 0 : index
    %c0_4 = arith.constant 0 : index
    %c0_5 = arith.constant 0 : index
    %2 = vector.load %arg1[%c0_3, %c0_4, %c0_5] : memref<2x16x12xf32, #tpu.memory_space<vmem>>, vector<1x16x12xf32>
    %3 = vector.shape_cast %2 : vector<1x16x12xf32> to vector<16x12xf32>
    %cst = arith.constant dense<0.000000e+00> : vector<16x128xf32>
    %4 = tpu.matmul %3, %0, %cst {dimension_numbers = #tpu.dot_dimension_numbers<[1], [0], [0], [1], [0, 0, 1, 1], [], []>} : vector<16x12xf32>, vector<12x128xf32>, vector<16x128xf32> -> vector<16x128xf32>
    %5 = vector.broadcast %1 : vector<1x128xf32> to vector<16x128xf32>
    %6 = arith.addf %4, %5 : vector<16x128xf32>
    %cst_6 = arith.constant 0.000000e+00 : f32
    %7 = vector.broadcast %cst_6 : f32 to vector<16x128xf32>
    %8 = arith.maximumf %6, %7 : vector<16x128xf32>
    %c1 = arith.constant 1 : index
    %c0_7 = arith.constant 0 : index
    %c0_8 = arith.constant 0 : index
    %9 = vector.load %arg1[%c1, %c0_7, %c0_8] : memref<2x16x12xf32, #tpu.memory_space<vmem>>, vector<1x16x12xf32>
    %10 = vector.shape_cast %9 : vector<1x16x12xf32> to vector<16x12xf32>
    %cst_9 = arith.constant dense<0.000000e+00> : vector<16x128xf32>
    %11 = tpu.matmul %10, %0, %cst_9 {dimension_numbers = #tpu.dot_dimension_numbers<[1], [0], [0], [1], [0, 0, 1, 1], [], []>} : vector<16x12xf32>, vector<12x128xf32>, vector<16x128xf32> -> vector<16x128xf32>
    %12 = vector.broadcast %1 : vector<1x128xf32> to vector<16x128xf32>
    %13 = arith.addf %11, %12 : vector<16x128xf32>
    %cst_10 = arith.constant 0.000000e+00 : f32
    %14 = vector.broadcast %cst_10 : f32 to vector<16x128xf32>
    %15 = arith.maximumf %13, %14 : vector<16x128xf32>
    %16 = arith.maximumf %8, %15 : vector<16x128xf32>
    %c0_11 = arith.constant 0 : index
    %c0_12 = arith.constant 0 : index
    %17 = vector.load %arg4[%c0_11, %c0_12] : memref<16x128xf32, #tpu.memory_space<vmem>>, vector<16x128xf32>
    tpu.vector_store %arg4[%c0_11, %c0_12], %16 {strides = array<i32>} : memref<16x128xf32, #tpu.memory_space<vmem>>, vector<16x128xf32>,
    return
  }
  func.func @transform_0(%arg0: i32) -> (i32, i32, i32) {
    %c0_i32 = arith.constant 0 : i32
    %c0_i32_0 = arith.constant 0 : i32
    %c0_i32_1 = arith.constant 0 : i32
    return %c0_i32, %arg0, %c0_i32_0 : i32, i32, i32
  }
  func.func @transform_1(%arg0: i32) -> (i32, i32) {
    %c0_i32 = arith.constant 0 : i32
    %c0_i32_0 = arith.constant 0 : i32
    %c0_i32_1 = arith.constant 0 : i32
    return %c0_i32, %c0_i32_0 : i32, i32
  }
  func.func @transform_2(%arg0: i32) -> (i32, i32) {
    %c0_i32 = arith.constant 0 : i32
    %c0_i32_0 = arith.constant 0 : i32
    %c0_i32_1 = arith.constant 0 : i32
    return %c0_i32, %c0_i32_0 : i32, i32
  }
  func.func @transform_3(%arg0: i32) -> (i32, i32) {
    %c0_i32 = arith.constant 0 : i32
    %c0_i32_0 = arith.constant 0 : i32
    return %arg0, %c0_i32 : i32, i32
  }
}

</mosaic_0001>

<llo_original>
// kernel: tpu_custom_call.1
$region0: #{tpu_custom_call.1}
  #allocation0 [shape = 'u32[]', space=smem, size = 0x4, offset = 0x4, fixed_abs, tag = 'smem constant byte address 0x4 - core index']
  #allocation1 [shape = 'u32[144,128]{1,0:T(1,128)}', space=vmem, size = 0x12000, scoped, tag = 'internal scratch']
  %s0 = inlined_call_operand.vmem [shape: f32[2,16,12], index: 0, kind: input, shape index: {}]
  %s1 = inlined_call_operand.vmem [shape: f32[12,128], index: 1, kind: input, shape index: {}]
  %s2 = inlined_call_operand.vmem [shape: f32[1,128], index: 2, kind: input, shape index: {}]
  %s3 = inlined_call_operand.hbm [shape: f32[16,128], index: 3, kind: output, shape index: {}]
  %s4 = sld [smem:[#allocation0]]
  $region22: #{tpu_custom_call.1} parent=0
    _
  %s6 = ssub.s32 1, %s4
  %s7 = scalar_select 0, %s6, %s4
  $region1: #{tpu_custom_call.1} parent=0
    #allocation2 [shape = 'u8[8192]{0}', space=vmem, size = 0x2000, scoped, tag = 'output window, operand 0, single buffered']
    #allocation3 [shape = 's32[1]{0}', space=sflag, size = 0x4, scoped, tag = 'scoped memory for tpu_custom_call.1']
    %8 = vsyncpa [#allocation3], 0
    // Predicated region
    $region2: #{tpu_custom_call.1} parent=1 // pred_check
      _
    $region3: #{tpu_custom_call.1} parent=1 // pred_check_branch
      %10 = sbr.rel (0) target = $region5
    $region4: #{tpu_custom_call.1} parent=1 // pred_region
      _
    $region5: #{tpu_custom_call.1} parent=1 // pred_fallthru
      _
    // Predicated region
    $region6: #{tpu_custom_call.1} parent=1 // pred_check
      _
    $region7: #{tpu_custom_call.1} parent=1 // pred_check_branch
      %12 = sbr.rel (0) target = $region9
    $region8: #{tpu_custom_call.1} parent=1 // pred_region
      _
    $region9: #{tpu_custom_call.1} parent=1 // pred_fallthru
      _
    // Predicated region
    $region10: #{tpu_custom_call.1} parent=1 // pred_check
      _
    $region11: #{tpu_custom_call.1} parent=1 // pred_check_branch
      %14 = sbr.rel (0) target = $region13
    $region12: #{tpu_custom_call.1} parent=1 // pred_region
      _
    $region13: #{tpu_custom_call.1} parent=1 // pred_fallthru
      _
    %v15 = vld [vmem:[%s1] sm:$0xff]
    %v16 = vld [vmem:[%s1 + $0x8] sm:$0xf]
    %v17 = vld [vmem:[%s2] sm:$0x1]
    %v18 = vld [vmem:[%s0] sm:$0xff]
    %v19 = vld [vmem:[%s0 + $0x8] sm:$0xff]
    %v21 = vlaneseq
    %v22 = vshrl.u32 %v21, 7
    %v23 = vsub.s32 0, %v22
    %v24 = vrot.slane %v17, %v23
    %vm26 = vcmask 97280
    %v28 = vsel %vm26, %v18, 0
    %v31 = vsel %vm26, %v19, 0
    %vm33 = vcmask 1043456
    %v35 = vsel %vm33, %v16, 0
    %37 = vmatprep.subr.mxu0 0.0
    %38 = vmatpush1.msra.mxu0 0.0
    %39 = vmatprep.subr.mxu0 0.0
    %40 = vmatpush1.msra.mxu0 0.0
    %41 = vmatprep.subr.mxu0 0.0
    %42 = vmatpush1.msra.mxu0 0.0
    %43 = vmatprep.subr.mxu0 0.0
    %44 = vmatpush1.msra.mxu0 0.0
    %45 = vmatprep.subr.mxu0 0.0
    %46 = vmatpush1.msra.mxu0 0.0
    %47 = vmatprep.subr.mxu0 0.0
    %48 = vmatpush1.msra.mxu0 0.0
    %49 = vmatprep.subr.mxu0 0.0
    %50 = vmatpush1.msra.mxu0 0.0
    %51 = vmatprep.subr.mxu0 0.0
    %52 = vmatpush1.msra.mxu0 0.0
    %53 = vmatprep.subr.mxu0 0.0
    %54 = vmatpush1.msra.mxu0 0.0
    %55 = vmatprep.subr.mxu0 0.0
    %56 = vmatpush1.msra.mxu0 0.0
    %57 = vmatprep.subr.mxu0 0.0
    %58 = vmatpush1.msra.mxu0 0.0
    %59 = vmatprep.subr.mxu0 0.0
    %60 = vmatpush1.msra.mxu0 0.0
    %61 = vmatprep.subr.mxu0 0.0
    %62 = vmatpush1.msra.mxu0 0.0
    %63 = vmatprep.subr.mxu0 0.0
    %64 = vmatpush1.msra.mxu0 0.0
    %65 = vmatprep.subr.mxu0 0.0
    %66 = vmatpush1.msra.mxu0 %v35
    %67 = vmatprep.subr.mxu0 0.0
    %68 = vmatpush1.msra.mxu0 %v15
    %69 = vmatprep.subr.mxu0 0.0
    %70 = vmatpush2.msra.mxu0 0.0
    %71 = vmatprep.subr.mxu0 0.0
    %72 = vmatpush2.msra.mxu0 0.0
    %73 = vmatprep.subr.mxu0 0.0
    %74 = vmatpush2.msra.mxu0 0.0
    %75 = vmatprep.subr.mxu0 0.0
    %76 = vmatpush2.msra.mxu0 0.0
    %77 = vmatprep.subr.mxu0 0.0
    %78 = vmatpush2.msra.mxu0 0.0
    %79 = vmatprep.subr.mxu0 0.0
    %80 = vmatpush2.msra.mxu0 0.0
    %81 = vmatprep.subr.mxu0 0.0
    %82 = vmatpush2.msra.mxu0 0.0
    %83 = vmatprep.subr.mxu0 0.0
    %84 = vmatpush2.msra.mxu0 0.0
    %85 = vmatprep.subr.mxu0 0.0
    %86 = vmatpush2.msra.mxu0 0.0
    %87 = vmatprep.subr.mxu0 0.0
    %88 = vmatpush2.msra.mxu0 0.0
    %89 = vmatprep.subr.mxu0 0.0
    %90 = vmatpush2.msra.mxu0 0.0
    %91 = vmatprep.subr.mxu0 0.0
    %92 = vmatpush2.msra.mxu0 0.0
    %93 = vmatprep.subr.mxu0 0.0
    %94 = vmatpush2.msra.mxu0 0.0
    %95 = vmatprep.subr.mxu0 0.0
    %96 = vmatpush2.msra.mxu0 0.0
    %97 = vmatprep.subr.mxu0 0.0
    %98 = vmatpush2.msra.mxu0 0.0
    %99 = vmatprep.subr.mxu0 0.0
    %100 = vmatpush2.msra.mxu0 0.0
    %101 = vmatprep.mubr.f32.mxu0 0.0
    %102 = vmatmul.mubr.f32.gmra.mxu0 %v28
    %v103 = vpop.f32.mrf.mxu0
    %v104 = vadd.f32 %v24, %v103
    %v105 = vpop.f32.mrf.mxu0
    %106 = vmatprep.mubr.f32.mxu0 0.0
    %107 = vmatmul.mubr.f32.gmra.mxu0 %v31
    %v108 = vpop.f32.mrf.mxu0
    %v109 = vadd.f32 %v24, %v108
    %v110 = vpop.f32.mrf.mxu0
    %111 = vdwg.mxu0
    %v112 = vmax.f32 %v104, 0.0
    %v113 = vmax.f32 %v109, 0.0
    %s114 = scalar_lea.vmem %s0, 16
    %v115 = vld [vmem:[%s114] sm:$0xff]
    %v116 = vld [vmem:[%s114 + $0x8] sm:$0xff]
    %v118 = vsel %vm26, %v115, 0
    %v121 = vsel %vm26, %v116, 0
    %123 = vmatprep.subr.mxu0 0.0
    %124 = vmatpush1.msra.mxu0 0.0
    %125 = vmatprep.subr.mxu0 0.0
    %126 = vmatpush1.msra.mxu0 0.0
    %127 = vmatprep.subr.mxu0 0.0
    %128 = vmatpush1.msra.mxu0 0.0
    %129 = vmatprep.subr.mxu0 0.0
    %130 = vmatpush1.msra.mxu0 0.0
    %131 = vmatprep.subr.mxu0 0.0
    %132 = vmatpush1.msra.mxu0 0.0
    %133 = vmatprep.subr.mxu0 0.0
    %134 = vmatpush1.msra.mxu0 0.0
    %135 = vmatprep.subr.mxu0 0.0
    %136 = vmatpush1.msra.mxu0 0.0
    %137 = vmatprep.subr.mxu0 0.0
    %138 = vmatpush1.msra.mxu0 0.0
    %139 = vmatprep.subr.mxu0 0.0
    %140 = vmatpush1.msra.mxu0 0.0
    %141 = vmatprep.subr.mxu0 0.0
    %142 = vmatpush1.msra.mxu0 0.0
    %143 = vmatprep.subr.mxu0 0.0
    %144 = vmatpush1.msra.mxu0 0.0
    %145 = vmatprep.subr.mxu0 0.0
    %146 = vmatpush1.msra.mxu0 0.0
    %147 = vmatprep.subr.mxu0 0.0
    %148 = vmatpush1.msra.mxu0 0.0
    %149 = vmatprep.subr.mxu0 0.0
    %150 = vmatpush1.msra.mxu0 0.0
    %151 = vmatprep.subr.mxu0 0.0
    %152 = vmatpush1.msra.mxu0 %v35
    %153 = vmatprep.subr.mxu0 0.0
    %154 = vmatpush1.msra.mxu0 %v15
    %155 = vmatprep.subr.mxu0 0.0
    %156 = vmatpush2.msra.mxu0 0.0
    %157 = vmatprep.subr.mxu0 0.0
    %158 = vmatpush2.msra.mxu0 0.0
    %159 = vmatprep.subr.mxu0 0.0
    %160 = vmatpush2.msra.mxu0 0.0
    %161 = vmatprep.subr.mxu0 0.0
    %162 = vmatpush2.msra.mxu0 0.0
    %163 = vmatprep.subr.mxu0 0.0
    %164 = vmatpush2.msra.mxu0 0.0
    %165 = vmatprep.subr.mxu0 0.0
    %166 = vmatpush2.msra.mxu0 0.0
    %167 = vmatprep.subr.mxu0 0.0
    %168 = vmatpush2.msra.mxu0 0.0
    %169 = vmatprep.subr.mxu0 0.0
    %170 = vmatpush2.msra.mxu0 0.0
    %171 = vmatprep.subr.mxu0 0.0
    %172 = vmatpush2.msra.mxu0 0.0
    %173 = vmatprep.subr.mxu0 0.0
    %174 = vmatpush2.msra.mxu0 0.0
    %175 = vmatprep.subr.mxu0 0.0
    %176 = vmatpush2.msra.mxu0 0.0
    %177 = vmatprep.subr.mxu0 0.0
    %178 = vmatpush2.msra.mxu0 0.0
    %179 = vmatprep.subr.mxu0 0.0
    %180 = vmatpush2.msra.mxu0 0.0
    %181 = vmatprep.subr.mxu0 0.0
    %182 = vmatpush2.msra.mxu0 0.0
    %183 = vmatprep.subr.mxu0 0.0
    %184 = vmatpush2.msra.mxu0 0.0
    %185 = vmatprep.subr.mxu0 0.0
    %186 = vmatpush2.msra.mxu0 0.0
    %187 = vmatprep.mubr.f32.mxu0 0.0
    %188 = vmatmul.mubr.f32.gmra.mxu0 %v118
    %v189 = vpop.f32.mrf.mxu0
    %v190 = vadd.f32 %v24, %v189
    %v191 = vpop.f32.mrf.mxu0
    %192 = vmatprep.mubr.f32.mxu0 0.0
    %193 = vmatmul.mubr.f32.gmra.mxu0 %v121
    %v194 = vpop.f32.mrf.mxu0
    %v195 = vadd.f32 %v24, %v194
    %v196 = vpop.f32.mrf.mxu0
    %197 = vdwg.mxu0
    %v198 = vmax.f32 %v190, 0.0
    %v199 = vmax.f32 %v195, 0.0
    %v200 = vmax.f32 %v112, %v198
    %v201 = vmax.f32 %v113, %v199
    %202 = vst [vmem:[#allocation2] sm:$0xff] %v200
    %203 = vst [vmem:[#allocation2 + $0x8] sm:$0xff] %v201
    // Predicated region
    $region14: #{tpu_custom_call.1} parent=1 // pred_check
      _
    $region15: #{tpu_custom_call.1} parent=1 // pred_check_branch
      %205 = sbr.rel (0) target = $region17
    $region16: #{tpu_custom_call.1} parent=1 // pred_region
      %s207 = ssub.s32 256, 256
      %208 = vsyncadd [#allocation3], %s207
      %s209 = sshll.u32 [#allocation2], 4
      %s210 = int_to_ptr.vmem [resolvable:$true] %s209
      %215 = dma.vmem_to_hbm [thread:$0]  %s210, 256, %s3, [#allocation3], 128, 128, 8
    $region17: #{tpu_custom_call.1} parent=1 // pred_fallthru
      _
    // Predicated region
    $region18: #{tpu_custom_call.1} parent=1 // pred_check
      _
    $region19: #{tpu_custom_call.1} parent=1 // pred_check_branch
      %217 = sbr.rel (0) target = $region21
    $region20: #{tpu_custom_call.1} parent=1 // pred_region
      %218 = dma.done [#allocation3], 256
    $region21: #{tpu_custom_call.1} parent=1 // pred_fallthru
      _
    %219 = vsyncpa [#allocation3], 1

</llo_original>
